<compile_context>
chip_gen: v6e
topology: v6e:2x2x1
jax: 0.10.0
libtpu: 0.0.40
codegen_flags: <defaults>
</compile_context>

<pallas_src>
import math

import jax
import jax.numpy as jnp
from jax.experimental import pallas as pl
from jax.experimental.pallas import tpu as pltpu


def _round_up(n: int, m: int) -> int:
    return (n + m - 1) // m * m


def _make_sinusoidal_kernel(pack: int):
    def kernel(x_ref, fm_ref, off_ref, out_ref):
        # x_ref  : (TR, pack)    f32 -- `pack` consecutive positions per row
        # fm_ref : (pack, row_w) f32 -- block-diagonal pe_scale-folded freqs
        # off_ref: (1, row_w)    f32 -- 0 for sin cols, pi/2 for cos cols
        # out_ref: (TR, row_w)       -- lane-dense; row r holds positions
        #                               r*pack .. r*pack+pack-1, each stored as
        #                               [ sin(half) | cos(half) ]
        # Full-lane-width phase via a tiny broadcast-accumulate (exact f32;
        # pack is 1-4 for realistic dims, so this is a handful of VPU ops).
        phase = x_ref[:, 0:1] * fm_ref[0:1, :]                       # (TR, row_w)
        for p in range(1, pack):                                     # tiny static unroll
            phase = phase + x_ref[:, p:p + 1] * fm_ref[p:p + 1, :]
        phase = phase + off_ref[...]                                 # cos(t) = sin(t + pi/2)
        # ONE full-width transcendental + ONE unmasked full-width store.
        out_ref[...] = jnp.sin(phase).astype(out_ref.dtype)

    return kernel


def sinusoidal_pos_emb_ref(x: jax.Array, dim: int, pe_scale: float) -> jax.Array:
    """Pure-JAX reference mirroring the PyTorch forward (same op order)."""
    half = dim // 2
    k = math.log(10000.0) / (half - 1)
    f = jnp.exp(jnp.arange(half, dtype=jnp.float32) * -k)
    emb = x.astype(jnp.float32)[:, None] * f[None, :] * pe_scale
    emb = jnp.concatenate([jnp.sin(emb), jnp.cos(emb)], axis=-1)
    return emb.astype(x.dtype)


def sinusoidal_pos_emb(x: jax.Array, dim: int, pe_scale: float, *,
                       max_rows_per_tile: int = 4096,
                       pallas_min_batch: int = 4096) -> jax.Array:
    """x: (B,) positions. Returns (B, dim) sinusoidal embeddings, dtype of x."""
    assert x.ndim == 1, "expected 1-D positions, matching PyTorch x[:, None]"
    assert dim % 2 == 0, "dim must be even (module only fills 2*(dim//2) columns)"
    assert dim >= 4, "dim >= 4 required (half_dim - 1 appears in a denominator)"

    B = x.shape[0]

    # Small batches (typical diffusion: 8-256 timesteps) are launch-overhead
    # bound for a standalone kernel; let XLA fuse the elementwise math instead.
    if B < pallas_min_batch:
        return sinusoidal_pos_emb_ref(x, dim, pe_scale)

    half = dim // 2
    pack = math.lcm(dim, 128) // dim          # positions packed per lane-dense row
    row_w = pack * dim                        # packed row width, multiple of 128

    rows = pl.cdiv(B, pack)
    # Row tile: multiple of 8, sized from a ~2 MiB f32-per-output-block budget
    # (4096 rows at row_w=128) so the HBM writeback of each grid step dwarfs
    # the ~0.35us per-step overhead.  Double-buffered in/out blocks + the
    # lane-padded (TR,128) x input buffer + elementwise temporaries stay well
    # under the 32 MiB scoped-VMEM limit requested below on all generations.
    block_budget = 2 * 1024 * 1024
    rows_by_vmem = max(8, (block_budget // (row_w * 4)) // 8 * 8)
    tile_rows = max(8, min(rows_by_vmem, max_rows_per_tile, _round_up(rows, 8)) // 8 * 8)
    n_tiles = pl.cdiv(rows, tile_rows)
    rows_pad = n_tiles * tile_rows
    n_pos_pad = rows_pad * pack

    x_f32 = x.astype(jnp.float32)
    if n_pos_pad != B:
        x_f32 = jnp.pad(x_f32, (0, n_pos_pad - B))       # zero-pad; sliced off below
    x_packed = x_f32.reshape(rows_pad, pack)

    # Host-precomputed tables (O(pack*row_w), computed once, fetched once).
    base = jnp.exp(jnp.arange(half, dtype=jnp.float32)
                   * jnp.float32(-math.log(10000.0) / (half - 1)))
    freq_one = jnp.concatenate([base, base]) * jnp.float32(pe_scale)       # (dim,)
    fm = jnp.kron(jnp.eye(pack, dtype=jnp.float32), freq_one[None, :])     # (pack, row_w)
    off = jnp.tile(
        jnp.concatenate([jnp.zeros((half,), jnp.float32),
                         jnp.full((half,), jnp.float32(math.pi / 2))]),
        pack).reshape(1, row_w)                                            # (1, row_w)

    out_packed = pl.pallas_call(
        _make_sinusoidal_kernel(pack),
        out_shape=jax.ShapeDtypeStruct((rows_pad, row_w), x.dtype),
        grid=(n_tiles,),
        in_specs=[
            pl.BlockSpec((tile_rows, pack), lambda i: (i, 0)),
            pl.BlockSpec((pack, row_w), lambda i: (0, 0)),   # constant block: fetched once
            pl.BlockSpec((1, row_w), lambda i: (0, 0)),      # constant block: fetched once
        ],
        out_specs=pl.BlockSpec((tile_rows, row_w), lambda i: (i, 0)),
        compiler_params=pltpu.CompilerParams(
            dimension_semantics=("parallel",),               # megacore-shard batch tiles
            vmem_limit_bytes=32 * 1024 * 1024,               # headroom for larger tiles on v5e
        ),
    )(x_packed, fm, off)

    # (rows_pad, pack*dim) row-major is bit-identical to (rows_pad*pack, dim).
    out = out_packed.reshape(rows_pad * pack, dim)
    return out[:B] if n_pos_pad != B else out


if __name__ == "__main__":
    k1, k2, k3, k4 = jax.random.split(jax.random.PRNGKey(0), 4)

    # Case 1: small dim=32 (pack=4 lane-packing path), pe_scale=1000, tiny batch
    # of diffusion-style timesteps; Pallas path forced (pallas_min_batch=0).
    x1 = jax.random.uniform(k1, (8,), dtype=jnp.float32)
    out1 = jax.block_until_ready(sinusoidal_pos_emb(x1, 32, 1000.0, pallas_min_batch=0))
    ref1 = sinusoidal_pos_emb_ref(x1, 32, 1000.0)
    assert out1.shape == (8, 32), out1.shape
    assert out1.dtype == x1.dtype, out1.dtype
    # pe_scale=1000 -> sin args are O(1e3); f32 phase quantization, the folded
    # pe_scale rounding order, and the cos(t)=sin(t+pi/2) offset each add
    # O(1e-4); structural bugs would be O(1), so compare at 2e-3.
    assert float(jnp.max(jnp.abs(out1 - ref1))) < 2e-3, "mismatch vs reference (dim=32)"

    # Case 2: lane-aligned dim=128 (pack=1 path), pe_scale=1.0 -> tight tolerance.
    x2 = jax.random.uniform(k2, (16,), dtype=jnp.float32)
    out2 = jax.block_until_ready(sinusoidal_pos_emb(x2, 128, 1.0, pallas_min_batch=0))
    ref2 = sinusoidal_pos_emb_ref(x2, 128, 1.0)
    assert out2.shape == (16, 128), out2.shape
    assert out2.dtype == x2.dtype, out2.dtype
    assert jnp.allclose(out2, ref2, atol=2e-5, rtol=1e-5), "mismatch vs reference (dim=128)"

    # Case 3: multi-tile grid + row padding (B=2000, dim=32 -> 500 packed rows ->
    # 4 tiles of 128 rows, 12 padded rows), Pallas path forced.
    x3 = jax.random.uniform(k3, (2000,), dtype=jnp.float32)
    out3 = jax.block_until_ready(
        sinusoidal_pos_emb(x3, 32, 1000.0, pallas_min_batch=0, max_rows_per_tile=128))
    ref3 = sinusoidal_pos_emb_ref(x3, 32, 1000.0)
    assert out3.shape == (2000, 32), out3.shape
    assert float(jnp.max(jnp.abs(out3 - ref3))) < 2e-3, "mismatch vs reference (multi-tile)"

    # Case 4: small-batch auto path short-circuits to the fused XLA reference.
    x4 = jax.random.uniform(k4, (8,), dtype=jnp.float32)
    out4 = jax.block_until_ready(sinusoidal_pos_emb(x4, 64, 1000.0))
    ref4 = sinusoidal_pos_emb_ref(x4, 64, 1000.0)
    assert out4.shape == (8, 64), out4.shape
    assert bool(jnp.array_equal(out4, ref4)), "small-batch fallback mismatch"

    print("KERNEL_OK")
</pallas_src>

<mosaic_0001>
module attributes {stable_mosaic.version = 11 : i64} {
  func.func @kernel(%arg0: i32, %arg1: memref<8x4xf32, #tpu.memory_space<vmem>>, %arg2: memref<4x128xf32, #tpu.memory_space<vmem>>, %arg3: memref<1x128xf32, #tpu.memory_space<vmem>>, %arg4: memref<8x128xf32, #tpu.memory_space<vmem>>) attributes {dimension_semantics = [#tpu.dimension_semantics<parallel>], iteration_bounds = array<i64: 1>, scalar_prefetch = 0 : i64, scratch_operands = 0 : i64, tpu.core_type = #tpu.core_type<tc>, window_params = [{transform_indices = @transform_0, window_bounds = array<i64: 8, 4>}, {pipeline_mode = #tpu.pipeline_mode<synchronous>, transform_indices = @transform_1, window_bounds = array<i64: 4, 128>}, {pipeline_mode = #tpu.pipeline_mode<synchronous>, transform_indices = @transform_2, window_bounds = array<i64: 1, 128>}, {transform_indices = @transform_3, window_bounds = array<i64: 8, 128>}]} {
    %c0 = arith.constant 0 : index
    %c0_0 = arith.constant 0 : index
    %0 = vector.load %arg1[%c0, %c0_0] : memref<8x4xf32, #tpu.memory_space<vmem>>, vector<8x1xf32>
    %c0_1 = arith.constant 0 : index
    %c0_2 = arith.constant 0 : index
    %1 = vector.load %arg2[%c0_1, %c0_2] : memref<4x128xf32, #tpu.memory_space<vmem>>, vector<1x128xf32>
    %2 = vector.broadcast %0 : vector<8x1xf32> to vector<8x128xf32>
    %3 = vector.broadcast %1 : vector<1x128xf32> to vector<8x128xf32>
    %4 = arith.mulf %2, %3 : vector<8x128xf32>
    %c0_3 = arith.constant 0 : index
    %c1 = arith.constant 1 : index
    %5 = vector.load %arg1[%c0_3, %c1] : memref<8x4xf32, #tpu.memory_space<vmem>>, vector<8x1xf32>
    %c1_4 = arith.constant 1 : index
    %c0_5 = arith.constant 0 : index
    %6 = vector.load %arg2[%c1_4, %c0_5] : memref<4x128xf32, #tpu.memory_space<vmem>>, vector<1x128xf32>
    %7 = vector.broadcast %5 : vector<8x1xf32> to vector<8x128xf32>
    %8 = vector.broadcast %6 : vector<1x128xf32> to vector<8x128xf32>
    %9 = arith.mulf %7, %8 : vector<8x128xf32>
    %10 = arith.addf %4, %9 : vector<8x128xf32>
    %c0_6 = arith.constant 0 : index
    %c2 = arith.constant 2 : index
    %11 = vector.load %arg1[%c0_6, %c2] : memref<8x4xf32, #tpu.memory_space<vmem>>, vector<8x1xf32>
    %c2_7 = arith.constant 2 : index
    %c0_8 = arith.constant 0 : index
    %12 = vector.load %arg2[%c2_7, %c0_8] : memref<4x128xf32, #tpu.memory_space<vmem>>, vector<1x128xf32>
    %13 = vector.broadcast %11 : vector<8x1xf32> to vector<8x128xf32>
    %14 = vector.broadcast %12 : vector<1x128xf32> to vector<8x128xf32>
    %15 = arith.mulf %13, %14 : vector<8x128xf32>
    %16 = arith.addf %10, %15 : vector<8x128xf32>
    %c0_9 = arith.constant 0 : index
    %c3 = arith.constant 3 : index
    %17 = vector.load %arg1[%c0_9, %c3] : memref<8x4xf32, #tpu.memory_space<vmem>>, vector<8x1xf32>
    %c3_10 = arith.constant 3 : index
    %c0_11 = arith.constant 0 : index
    %18 = vector.load %arg2[%c3_10, %c0_11] : memref<4x128xf32, #tpu.memory_space<vmem>>, vector<1x128xf32>
    %19 = vector.broadcast %17 : vector<8x1xf32> to vector<8x128xf32>
    %20 = vector.broadcast %18 : vector<1x128xf32> to vector<8x128xf32>
    %21 = arith.mulf %19, %20 : vector<8x128xf32>
    %22 = arith.addf %16, %21 : vector<8x128xf32>
    %c0_12 = arith.constant 0 : index
    %c0_13 = arith.constant 0 : index
    %23 = vector.load %arg3[%c0_12, %c0_13] : memref<1x128xf32, #tpu.memory_space<vmem>>, vector<1x128xf32>
    %24 = vector.broadcast %23 : vector<1x128xf32> to vector<8x128xf32>
    %25 = arith.addf %22, %24 : vector<8x128xf32>
    %26 = math.sin %25 : vector<8x128xf32>
    %c0_14 = arith.constant 0 : index
    %c0_15 = arith.constant 0 : index
    %27 = vector.load %arg4[%c0_14, %c0_15] : memref<8x128xf32, #tpu.memory_space<vmem>>, vector<8x128xf32>
    tpu.vector_store %arg4[%c0_14, %c0_15], %26 {strides = array<i32>} : memref<8x128xf32, #tpu.memory_space<vmem>>, vector<8x128xf32>,
    return
  }
  func.func @transform_0(%arg0: i32) -> (i32, i32) {
    %c0_i32 = arith.constant 0 : i32
    %c0_i32_0 = arith.constant 0 : i32
    return %arg0, %c0_i32 : i32, i32
  }
  func.func @transform_1(%arg0: i32) -> (i32, i32) {
    %c0_i32 = arith.constant 0 : i32
    %c0_i32_0 = arith.constant 0 : i32
    %c0_i32_1 = arith.constant 0 : i32
    return %c0_i32, %c0_i32_0 : i32, i32
  }
  func.func @transform_2(%arg0: i32) -> (i32, i32) {
    %c0_i32 = arith.constant 0 : i32
    %c0_i32_0 = arith.constant 0 : i32
    %c0_i32_1 = arith.constant 0 : i32
    return %c0_i32, %c0_i32_0 : i32, i32
  }
  func.func @transform_3(%arg0: i32) -> (i32, i32) {
    %c0_i32 = arith.constant 0 : i32
    %c0_i32_0 = arith.constant 0 : i32
    return %arg0, %c0_i32 : i32, i32
  }
}

</mosaic_0001>

<llo_original>
// kernel: tpu_custom_call.1
$region0: #{tpu_custom_call.1}
  #allocation0 [shape = 'u32[]', space=smem, size = 0x4, offset = 0x4, fixed_abs, tag = 'smem constant byte address 0x4 - core index']
  #allocation1 [shape = 'u32[144,128]{1,0:T(1,128)}', space=vmem, size = 0x12000, scoped, tag = 'internal scratch']
  %s0 = inlined_call_operand.vmem [shape: f32[8,4], index: 0, kind: input, shape index: {}]
  %s1 = inlined_call_operand.vmem [shape: f32[4,128], index: 1, kind: input, shape index: {}]
  %s2 = inlined_call_operand.vmem [shape: f32[1,128], index: 2, kind: input, shape index: {}]
  %s3 = inlined_call_operand.hbm [shape: f32[8,128], index: 3, kind: output, shape index: {}]
  %s4 = sld [smem:[#allocation0]]
  $region22: #{tpu_custom_call.1} parent=0
    _
  %s6 = ssub.s32 1, %s4
  %s7 = scalar_select 0, %s6, %s4
  $region1: #{tpu_custom_call.1} parent=0
    #allocation2 [shape = 'u8[4096]{0}', space=vmem, size = 0x1000, scoped, tag = 'output window, operand 0, single buffered']
    #allocation3 [shape = 's32[1]{0}', space=sflag, size = 0x4, scoped, tag = 'scoped memory for tpu_custom_call.1']
    %8 = vsyncpa [#allocation3], 0
    // Predicated region
    $region2: #{tpu_custom_call.1} parent=1 // pred_check
      _
    $region3: #{tpu_custom_call.1} parent=1 // pred_check_branch
      %10 = sbr.rel (0) target = $region5
    $region4: #{tpu_custom_call.1} parent=1 // pred_region
      _
    $region5: #{tpu_custom_call.1} parent=1 // pred_fallthru
      _
    // Predicated region
    $region6: #{tpu_custom_call.1} parent=1 // pred_check
      _
    $region7: #{tpu_custom_call.1} parent=1 // pred_check_branch
      %12 = sbr.rel (0) target = $region9
    $region8: #{tpu_custom_call.1} parent=1 // pred_region
      _
    $region9: #{tpu_custom_call.1} parent=1 // pred_fallthru
      _
    // Predicated region
    $region10: #{tpu_custom_call.1} parent=1 // pred_check
      _
    $region11: #{tpu_custom_call.1} parent=1 // pred_check_branch
      %14 = sbr.rel (0) target = $region13
    $region12: #{tpu_custom_call.1} parent=1 // pred_region
      _
    $region13: #{tpu_custom_call.1} parent=1 // pred_fallthru
      _
    %v15 = vld [vmem:[%s0] sm:$0xff]
    %v16 = vld [vmem:[%s1] sm:$0x1]
    %18 = vset.pattern.permute.xlu0 0
    %19 = vperm.xlu0 %18, %v15
    %v20 = vpop.permute.xlu0 %19
    %v22 = vlaneseq
    %v23 = vshrl.u32 %v22, 7
    %v24 = vsub.s32 0, %v23
    %v25 = vrot.slane %v16, %v24
    %v26 = vmul.f32 %v20, %v25
    %v27 = vld [vmem:[%s1 + $0x1] sm:$0x1]
    %28 = vset.pattern.permute.xlu0 1
    %29 = vperm.xlu0 %28, %v15
    %v30 = vpop.permute.xlu0 %29
    %v32 = vlaneseq
    %v33 = vshrl.u32 %v32, 7
    %v34 = vsub.s32 0, %v33
    %v35 = vrot.slane %v27, %v34
    %v36 = vmul.f32 %v30, %v35
    %v37 = vadd.f32 %v26, %v36
    %v38 = vld [vmem:[%s1 + $0x2] sm:$0x1]
    %39 = vset.pattern.permute.xlu0 2
    %40 = vperm.xlu0 %39, %v15
    %v41 = vpop.permute.xlu0 %40
    %v43 = vlaneseq
    %v44 = vshrl.u32 %v43, 7
    %v45 = vsub.s32 0, %v44
    %v46 = vrot.slane %v38, %v45
    %v47 = vmul.f32 %v41, %v46
    %v48 = vadd.f32 %v37, %v47
    %v49 = vld [vmem:[%s1 + $0x3] sm:$0x1]
    %50 = vset.pattern.permute.xlu0 3
    %51 = vperm.xlu0 %50, %v15
    %v52 = vpop.permute.xlu0 %51
    %v54 = vlaneseq
    %v55 = vshrl.u32 %v54, 7
    %v56 = vsub.s32 0, %v55
    %v57 = vrot.slane %v49, %v56
    %v58 = vmul.f32 %v52, %v57
    %v59 = vadd.f32 %v48, %v58
    %v60 = vld [vmem:[%s2] sm:$0x1]
    %v62 = vlaneseq
    %v63 = vshrl.u32 %v62, 7
    %v64 = vsub.s32 0, %v63
    %v65 = vrot.slane %v60, %v64
    %v67 = vadd.f32 %v59, %v65
    %v68 = vand.u32 2147483647, %v67
    %vm69 = vcmp.le.f32.partialorder %v68, 0.7853982
    %vm70 = vcmp.lt.s32.totalorder %v67, 0
    %v71 = vand.u32 %v67, 2139095040
    %v72 = vshrl.u32 %v71, 23
    %v73 = vsub.s32 %v72, 127
    %v74 = vand.u32 2147483647, %v67
    %v75 = vand.u32 %v74, 8388607
    %v76 = vor.u32 %v75, 8388608
    %v77 = vsub.s32 0, %v76
    %v78 = vadd.s32 %v73, 1
    %vm79 = vcmp.gt.s32.totalorder %v78, 0
    %v80 = vsel %vm79, %v78, 0
    %v81 = vshrl.u32 %v80, 5
    %v82 = vand.u32 %v80, 31
    %v83 = vsub.s32 32, %v82
    %v84 = vshrl.u32 683565275, %v83
    %v85 = vshll.u32 683565275, %v82
    %v86 = vshrl.u32 2475754826, %v83
    %v87 = vor.u32 %v85, %v86
    %v88 = vshll.u32 2475754826, %v82
    %v89 = vshrl.u32 2131351028, %v83
    %v90 = vor.u32 %v88, %v89
    %v91 = vshll.u32 2131351028, %v82
    %v92 = vshrl.u32 2102212464, %v83
    %v93 = vor.u32 %v91, %v92
    %v94 = vshll.u32 2102212464, %v82
    %v95 = vshrl.u32 920167782, %v83
    %v96 = vor.u32 %v94, %v95
    %v97 = vshll.u32 920167782, %v82
    %v98 = vshrl.u32 1326507024, %v83
    %v99 = vor.u32 %v97, %v98
    %vm100 = vcmp.lt.s32.totalorder %v81, 1
    %vm101 = vcmp.lt.s32.totalorder %v81, 2
    %vm102 = vcmp.lt.s32.totalorder %v81, 3
    %vm103 = vcmp.lt.s32.totalorder %v81, 4
    %v104 = vsel %vm100, %v84, %v87
    %v105 = vsel %vm103, %v93, 2102212464
    %v106 = vsel %vm102, %v90, %v105
    %v107 = vsel %vm101, %v104, %v106
    %v108 = vsel %vm100, %v87, %v90
    %v109 = vsel %vm103, %v96, 920167782
    %v110 = vsel %vm102, %v93, %v109
    %v111 = vsel %vm101, %v108, %v110
    %v112 = vsel %vm100, %v90, %v93
    %v113 = vsel %vm103, %v99, 1326507024
    %v114 = vsel %vm102, %v96, %v113
    %v115 = vsel %vm101, %v112, %v114
    %v116 = vshll.u32 %v76, 8
    %v117 = vmul.u32.u64.compose %v116, %v115
    %v118 = vextract.low.u32 %v117
    %v119 = vextract.high.u32 %v117
    %v120 = vmul.u32.u64.compose %v116, %v111
    %v121 = vextract.low.u32 %v120
    %v122 = vextract.high.u32 %v120
    %v123 = vmul.u32 %v116, %v107
    %v124 = vadd.s32 %v119, %v121
    %vm125 = vc.u32 %v119, %v121
    %v126 = vadd.s32 %v122, 1
    %v127 = vsel %vm125, %v126, %v122
    %v128 = vadd.s32 %v123, %v127
    %v129 = vadd.s32 %v128, 536870912
    %v130 = vshrl.u32 %v129, 30
    %v131 = vshll.u32 %v130, 30
    %v132 = vsub.s32 %v128, %v131
    %vm133 = vcmp.lt.s32.totalorder %v132, 0
    %v134 = vsub.s32 0, %v132
    %v135 = vsel %vm133, %v134, %v132
    %v136 = vclz %v135
    %v137 = vsub.s32 %v136, 2
    %vm138 = vcmp.gt.s32.totalorder 0, %v137
    %v139 = vsel %vm138, 0, %v137
    %v140 = vsub.s32 32, %v139
    %v141 = vshll.u32 %v132, %v139
    %v142 = vshrl.u32 %v124, %v140
    %v143 = vor.u32 %v141, %v142
    %v144 = vsub.s32 4294967266, %v139
    %v145 = vadd.s32 %v144, 127
    %v146 = vshll.u32 %v145, 23
    %v147 = vor.u32 4788187, %v146
    %v148 = vand.u32 2147483647, %v147
    %v150 = vcvt.s32.f32 %v143
    %v151 = vmul.f32 %v150, %v148
    %v152 = vxor.u32 %v151, 2147483648
    %v153 = vsel %vm70, %v152, %v151
    %v154 = vsub.s32 4, %v130
    %v155 = vsel %vm70, %v154, %v130
    %v156 = vsel %vm69, %v67, %v153
    %v157 = vsel %vm69, 0, %v155
    %v158 = vcosq.f32.pop %v156
    %v159 = vsinq.f32.pop %v156
    %vm160 = vweird.f32 %v67
    %v161 = vadd.s32 %v157, 3
    %v162 = vand.u32 %v161, 3
    %vm163 = vcmp.lt.s32.totalorder %v162, 2
    %vm164 = vcmp.eq.s32.totalorder %v162, 0
    %v165 = vxor.u32 %v159, 2147483648
    %v166 = vsel %vm164, %v158, %v165
    %vm167 = vcmp.eq.s32.totalorder %v162, 2
    %v168 = vxor.u32 %v158, 2147483648
    %v169 = vsel %vm167, %v168, %v159
    %v170 = vsel %vm163, %v166, %v169
    %v171 = vsel %vm160, nan, %v170
    %172 = vst [vmem:[#allocation2] sm:$0xff] %v171
    // Predicated region
    $region14: #{tpu_custom_call.1} parent=1 // pred_check
      _
    $region15: #{tpu_custom_call.1} parent=1 // pred_check_branch
      %174 = sbr.rel (0) target = $region17
    $region16: #{tpu_custom_call.1} parent=1 // pred_region
      %s176 = ssub.s32 128, 128
      %177 = vsyncadd [#allocation3], %s176
      %s179 = sshll.u32 [#allocation2], 4
      %s180 = int_to_ptr.vmem [resolvable:$true] %s179
      %182 = dma.vmem_to_hbm [thread:$0]  %s180, 128, %s3, [#allocation3]
    $region17: #{tpu_custom_call.1} parent=1 // pred_fallthru
      _
    // Predicated region
    $region18: #{tpu_custom_call.1} parent=1 // pred_check
      _
    $region19: #{tpu_custom_call.1} parent=1 // pred_check_branch
      %184 = sbr.rel (0) target = $region21
    $region20: #{tpu_custom_call.1} parent=1 // pred_region
      %185 = dma.done [#allocation3], 128
    $region21: #{tpu_custom_call.1} parent=1 // pred_fallthru
      _
    %186 = vsyncpa [#allocation3], 1

</llo_original>
